<compile_context>
chip_gen: v5e
topology: v5e:2x2
jax: 0.10.0
libtpu: 0.0.40
codegen_flags: <defaults>
</compile_context>

<pallas_src>
import math

import jax
import jax.numpy as jnp
from jax.experimental import pallas as pl
from jax.experimental.pallas import tpu as pltpu

EPS = 1e-5  # nn.LayerNorm default


def _round_up(x, m):
    return ((x + m - 1) // m) * m


def prenorm_kernel(x_ref, g_ref, w_ref, fb_ref, o_ref, y_scr):
    """One (row-block, col-block) tile of fused LayerNorm(D) + Linear(D->D_out).

    x_ref : (tm, D)     input rows
    g_ref : (1, D)      LayerNorm gamma (f32)
    w_ref : (D, tn)     Linear weight column block (in, out), MXU dtype
    fb_ref: (1, tn)     fused bias block = beta @ W + linear_bias (f32)
    o_ref : (tm, tn)    output tile
    y_scr : (tm, D)     VMEM scratch: normalized rows in MXU dtype, computed
                        once per row block (col index j == 0), reused across j.
    """
    j = pl.program_id(1)

    @pl.when(j == 0)
    def _():
        # LayerNorm statistics in f32 regardless of input / MXU dtype.
        # Single pass: sum and sum-of-squares (one fewer XLU reduction sweep).
        x = x_ref[...].astype(jnp.float32)
        d_inv = 1.0 / x.shape[-1]
        s = jnp.sum(x, axis=-1, keepdims=True)
        s2 = jnp.sum(x * x, axis=-1, keepdims=True)
        mean = s * d_inv
        var = jnp.maximum(s2 * d_inv - mean * mean, 0.0)  # biased, as PyTorch LN
        inv = jax.lax.rsqrt(var + EPS)
        y = (x - mean) * inv * g_ref[...]
        y_scr[...] = y.astype(y_scr.dtype)

    # fn = Linear: out = y @ W_block + fused_bias_block (f32 accumulation on MXU)
    out = jnp.dot(y_scr[...], w_ref[...], preferred_element_type=jnp.float32)
    o_ref[...] = (out + fb_ref[...]).astype(o_ref.dtype)


def prenorm_linear(x, gamma, beta, w_t, lin_b, *, tm=512, tn=512,
                   compute_dtype=None):
    """Fused y = LayerNorm(x) @ W + b.   x: (B, N, D) -> (B, N, D_out).

    w_t is stored (in, out). compute_dtype controls the dtype fed to the MXU
    (defaults to w_t.dtype; use jnp.bfloat16 on v5e/v6e/v7x for max throughput).
    """
    B, N, D = x.shape
    D_in, D_out = w_t.shape
    assert D_in == D
    R = B * N

    if compute_dtype is None:
        compute_dtype = w_t.dtype

    x_size = jnp.dtype(x.dtype).itemsize
    c_size = jnp.dtype(compute_dtype).itemsize
    o_size = x_size  # output emitted in x.dtype

    # ---- per-generation VMEM cap (v7x: 64 MiB/TC; v5e/v6e: 128 MiB) ---------
    try:
        phys_vmem = int(pltpu.get_tpu_info().vmem_capacity_bytes)
    except Exception:
        phys_vmem = 64 * 1024 * 1024  # conservative (v7x) if query unavailable
    vmem_cap = max(32 * 1024 * 1024, phys_vmem - 16 * 1024 * 1024)
    budget = int(vmem_cap * 0.9)      # leave room for compiler scratch

    # ---- row tiling (large tiles; pad rows so any B*N works) ----------------
    row_align = 8 if x_size == 4 else (16 if x_size == 2 else 32)
    tm_eff = min(tm, _round_up(R, row_align))
    tm_eff = _round_up(tm_eff, row_align)
    # Megacore: guarantee >= 2 row blocks on the "parallel" axis when R allows.
    if R >= 2 * row_align:
        tm_eff = min(tm_eff, _round_up(pl.cdiv(R, 2), row_align))

    def vmem_needed(tm_, tn_):
        return (2 * tm_ * D * x_size        # x tiles (double-buffered)
                + 2 * D * tn_ * c_size      # W blocks
                + 2 * tm_ * tn_ * o_size    # out tiles
                + 2 * D * 4                 # gamma
                + 2 * tn_ * 4               # fused bias
                + tm_ * D * c_size)         # y scratch

    # ---- output-column tiling ------------------------------------------------
    # Prefer whole-W residency: constant W block index -> W is DMA'd once.
    if vmem_needed(tm_eff, D_out) <= budget:
        tn_eff = D_out
        D_out_p = D_out
    else:
        # Stream W in lane-dense (multiple-of-128) column blocks; pad D_out up
        # to a multiple of the tile instead of falling back to full residency.
        tn_eff = _round_up(min(max(tn, 128), _round_up(D_out, 128)), 128)
        while vmem_needed(tm_eff, tn_eff) > budget and tn_eff > 128:
            tn_eff = _round_up(max(tn_eff // 2, 128), 128)
        while vmem_needed(tm_eff, tn_eff) > budget and tm_eff > row_align:
            tm_eff = max(_round_up(tm_eff // 2, row_align), row_align)
        D_out_p = _round_up(D_out, tn_eff)

    Rp = _round_up(R, tm_eff)

    # ---- operand prep --------------------------------------------------------
    xf = x.reshape(R, D)
    if Rp != R:
        xf = jnp.pad(xf, ((0, Rp - R), (0, 0)))

    g2 = gamma.reshape(1, D).astype(jnp.float32)
    w_mxu = w_t.astype(compute_dtype)
    # Fold LN beta through the linear layer (affine-before-linear identity):
    #   (xc*inv*g + beta) @ W + b = (xc*inv*g) @ W + (beta @ W + b)
    fused_bias = (beta.astype(jnp.float32) @ w_t.astype(jnp.float32)
                  + lin_b.astype(jnp.float32)).reshape(1, D_out)
    if D_out_p != D_out:
        w_mxu = jnp.pad(w_mxu, ((0, 0), (0, D_out_p - D_out)))
        fused_bias = jnp.pad(fused_bias, ((0, 0), (0, D_out_p - D_out)))

    grid = (Rp // tm_eff, D_out_p // tn_eff)

    vmem_limit = min(vmem_cap,
                     max(32 * 1024 * 1024,
                         int(vmem_needed(tm_eff, tn_eff) * 1.25) + (2 << 20)))

    out = pl.pallas_call(
        prenorm_kernel,
        out_shape=jax.ShapeDtypeStruct((Rp, D_out_p), x.dtype),
        grid_spec=pltpu.PrefetchScalarGridSpec(
            num_scalar_prefetch=0,
            grid=grid,
            in_specs=[
                pl.BlockSpec((tm_eff, D), lambda i, j: (i, 0)),   # x rows (reused over j)
                pl.BlockSpec((1, D), lambda i, j: (0, 0)),        # gamma
                pl.BlockSpec((D, tn_eff), lambda i, j: (0, j)),   # W column block
                pl.BlockSpec((1, tn_eff), lambda i, j: (0, j)),   # fused bias block
            ],
            out_specs=pl.BlockSpec((tm_eff, tn_eff), lambda i, j: (i, j)),
            scratch_shapes=[pltpu.VMEM((tm_eff, D), compute_dtype)],
        ),
        compiler_params=pltpu.CompilerParams(
            # Row axis parallel (megacore); column axis must stay sequential
            # and innermost because of the y_scr reuse across j.
            dimension_semantics=("parallel", "arbitrary"),
            vmem_limit_bytes=vmem_limit,
        ),
    )(xf, g2, w_mxu, fused_bias)

    if Rp != R:
        out = out[:R]
    if D_out_p != D_out:
        out = out[:, :D_out]
    return out.reshape(B, N, D_out)


def reference(x, gamma, beta, w_t, lin_b):
    xf = x.astype(jnp.float32)
    mean = jnp.mean(xf, axis=-1, keepdims=True)
    var = jnp.mean((xf - mean) ** 2, axis=-1, keepdims=True)
    y = (xf - mean) / jnp.sqrt(var + EPS) * gamma + beta
    return y @ w_t + lin_b


if __name__ == "__main__":
    # Small deterministic setup: batch=2, seq=8, dim=32.
    # NOTE: real deployments should use D that is a multiple of 128 for
    # lane-dense stores and full MXU columns; the demo stays small on purpose.
    B, N, D = 2, 8, 32
    key = jax.random.PRNGKey(0)
    kx, kg, kb, kw, klb = jax.random.split(key, 5)

    x = jax.random.normal(kx, (B, N, D), dtype=jnp.float32)

    # LayerNorm params (non-trivial values so the beta-folding path is tested).
    gamma = 1.0 + 0.1 * jax.random.normal(kg, (D,), jnp.float32)
    beta = 0.1 * jax.random.normal(kb, (D,), jnp.float32)

    # fn := Linear(D, D), deterministic init, stored pre-transposed (in, out).
    w_t = (jax.random.normal(kw, (D, D), jnp.float32) / jnp.sqrt(D)).astype(jnp.float32)
    lin_b = (jax.random.normal(klb, (D,), jnp.float32) * 0.01).astype(jnp.float32)

    ref = reference(x, gamma, beta, w_t, lin_b)

    # 1) f32 MXU path (native weight dtype) — tight tolerance.
    out = prenorm_linear(x, gamma, beta, w_t, lin_b)
    out = jax.block_until_ready(out)
    assert out.shape == (B, N, D)
    assert jnp.allclose(out, ref, atol=1e-4, rtol=1e-4), "f32 path mismatch vs reference"

    # 2) bf16 operands into the MXU (recommended on v5e/v6e/v7x) — loose tolerance.
    out_bf16 = prenorm_linear(x, gamma, beta, w_t, lin_b,
                              compute_dtype=jnp.bfloat16)
    out_bf16 = jax.block_until_ready(out_bf16)
    assert out_bf16.shape == (B, N, D)
    assert jnp.allclose(out_bf16, ref, atol=1e-1, rtol=1e-1), "bf16 path mismatch vs reference"

    print("KERNEL_OK")
</pallas_src>

<mosaic_0001>
module attributes {stable_mosaic.version = 11 : i64} {
  func.func @prenorm_kernel(%arg0: i32, %arg1: i32, %arg2: memref<8x32xf32, #tpu.memory_space<vmem>>, %arg3: memref<1x32xf32, #tpu.memory_space<vmem>>, %arg4: memref<32x32xf32, #tpu.memory_space<vmem>>, %arg5: memref<1x32xf32, #tpu.memory_space<vmem>>, %arg6: memref<8x32xf32, #tpu.memory_space<vmem>>, %arg7: memref<8x32xf32, #tpu.memory_space<vmem>>) attributes {dimension_semantics = [#tpu.dimension_semantics<parallel>, #tpu.dimension_semantics<arbitrary>], iteration_bounds = array<i64: 2, 1>, scalar_prefetch = 0 : i64, scratch_operands = 1 : i64, tpu.core_type = #tpu.core_type<tc>, window_params = [{transform_indices = @transform_0, window_bounds = array<i64: 8, 32>}, {pipeline_mode = #tpu.pipeline_mode<synchronous>, transform_indices = @transform_1, window_bounds = array<i64: 1, 32>}, {transform_indices = @transform_2, window_bounds = array<i64: 32, 32>}, {transform_indices = @transform_3, window_bounds = array<i64: 1, 32>}, {transform_indices = @transform_4, window_bounds = array<i64: 8, 32>}]} {
    %c0_i32 = arith.constant 0 : i32
    %0 = arith.cmpi eq, %arg1, %c0_i32 : i32
    %1 = arith.extui %0 : i1 to i32
    %c0_i32_0 = arith.constant 0 : i32
    %2 = arith.cmpi ne, %1, %c0_i32_0 : i32
    scf.if %2 {
      %c0_8 = arith.constant 0 : index
      %c0_9 = arith.constant 0 : index
      %10 = vector.load %arg2[%c0_8, %c0_9] : memref<8x32xf32, #tpu.memory_space<vmem>>, vector<8x32xf32>
      %cst_10 = arith.constant dense<0.000000e+00> : vector<8xf32>
      %11 = vector.multi_reduction <add>, %10, %cst_10 [1] : vector<8x32xf32> to vector<8xf32>
      %12 = vector.shape_cast %11 : vector<8xf32> to vector<8x1xf32>
      %13 = arith.mulf %10, %10 : vector<8x32xf32>
      %cst_11 = arith.constant dense<0.000000e+00> : vector<8xf32>
      %14 = vector.multi_reduction <add>, %13, %cst_11 [1] : vector<8x32xf32> to vector<8xf32>
      %15 = vector.shape_cast %14 : vector<8xf32> to vector<8x1xf32>
      %cst_12 = arith.constant 3.125000e-02 : f32
      %16 = vector.broadcast %cst_12 : f32 to vector<8x1xf32>
      %17 = arith.mulf %12, %16 : vector<8x1xf32>
      %cst_13 = arith.constant 3.125000e-02 : f32
      %18 = vector.broadcast %cst_13 : f32 to vector<8x1xf32>
      %19 = arith.mulf %15, %18 : vector<8x1xf32>
      %20 = arith.mulf %17, %17 : vector<8x1xf32>
      %21 = arith.subf %19, %20 : vector<8x1xf32>
      %cst_14 = arith.constant 0.000000e+00 : f32
      %22 = vector.broadcast %cst_14 : f32 to vector<8x1xf32>
      %23 = arith.maximumf %21, %22 : vector<8x1xf32>
      %cst_15 = arith.constant 9.99999974E-6 : f32
      %24 = vector.broadcast %cst_15 : f32 to vector<8x1xf32>
      %25 = arith.addf %23, %24 : vector<8x1xf32>
      %26 = math.rsqrt %25 : vector<8x1xf32>
      %27 = vector.broadcast %17 : vector<8x1xf32> to vector<8x32xf32>
      %28 = arith.subf %10, %27 : vector<8x32xf32>
      %29 = vector.broadcast %26 : vector<8x1xf32> to vector<8x32xf32>
      %30 = arith.mulf %28, %29 : vector<8x32xf32>
      %c0_16 = arith.constant 0 : index
      %c0_17 = arith.constant 0 : index
      %31 = vector.load %arg3[%c0_16, %c0_17] : memref<1x32xf32, #tpu.memory_space<vmem>>, vector<1x32xf32>
      %32 = vector.broadcast %31 : vector<1x32xf32> to vector<8x32xf32>
      %33 = arith.mulf %30, %32 : vector<8x32xf32>
      %c0_18 = arith.constant 0 : index
      %c0_19 = arith.constant 0 : index
      %34 = vector.load %arg7[%c0_18, %c0_19] : memref<8x32xf32, #tpu.memory_space<vmem>>, vector<8x32xf32>
      tpu.vector_store %arg7[%c0_18, %c0_19], %33 {strides = array<i32>} : memref<8x32xf32, #tpu.memory_space<vmem>>, vector<8x32xf32>,
    } else {
    }
    %c0 = arith.constant 0 : index
    %c0_1 = arith.constant 0 : index
    %3 = vector.load %arg7[%c0, %c0_1] : memref<8x32xf32, #tpu.memory_space<vmem>>, vector<8x32xf32>
    %c0_2 = arith.constant 0 : index
    %c0_3 = arith.constant 0 : index
    %4 = vector.load %arg4[%c0_2, %c0_3] : memref<32x32xf32, #tpu.memory_space<vmem>>, vector<32x32xf32>
    %cst = arith.constant dense<0.000000e+00> : vector<8x32xf32>
    %5 = tpu.matmul %3, %4, %cst {dimension_numbers = #tpu.dot_dimension_numbers<[1], [0], [0], [1], [0, 0, 1, 1], [], []>} : vector<8x32xf32>, vector<32x32xf32>, vector<8x32xf32> -> vector<8x32xf32>
    %c0_4 = arith.constant 0 : index
    %c0_5 = arith.constant 0 : index
    %6 = vector.load %arg5[%c0_4, %c0_5] : memref<1x32xf32, #tpu.memory_space<vmem>>, vector<1x32xf32>
    %7 = vector.broadcast %6 : vector<1x32xf32> to vector<8x32xf32>
    %8 = arith.addf %5, %7 : vector<8x32xf32>
    %c0_6 = arith.constant 0 : index
    %c0_7 = arith.constant 0 : index
    %9 = vector.load %arg6[%c0_6, %c0_7] : memref<8x32xf32, #tpu.memory_space<vmem>>, vector<8x32xf32>
    tpu.vector_store %arg6[%c0_6, %c0_7], %8 {strides = array<i32>} : memref<8x32xf32, #tpu.memory_space<vmem>>, vector<8x32xf32>,
    return
  }
  func.func @transform_0(%arg0: i32, %arg1: i32) -> (i32, i32) {
    %c0_i32 = arith.constant 0 : i32
    %c0_i32_0 = arith.constant 0 : i32
    return %arg0, %c0_i32 : i32, i32
  }
  func.func @transform_1(%arg0: i32, %arg1: i32) -> (i32, i32) {
    %c0_i32 = arith.constant 0 : i32
    %c0_i32_0 = arith.constant 0 : i32
    %c0_i32_1 = arith.constant 0 : i32
    return %c0_i32, %c0_i32_0 : i32, i32
  }
  func.func @transform_2(%arg0: i32, %arg1: i32) -> (i32, i32) {
    %c0_i32 = arith.constant 0 : i32
    %c0_i32_0 = arith.constant 0 : i32
    return %c0_i32, %arg1 : i32, i32
  }
  func.func @transform_3(%arg0: i32, %arg1: i32) -> (i32, i32) {
    %c0_i32 = arith.constant 0 : i32
    %c0_i32_0 = arith.constant 0 : i32
    return %c0_i32, %arg1 : i32, i32
  }
  func.func @transform_4(%arg0: i32, %arg1: i32) -> (i32, i32) {
    %c0_i32 = arith.constant 0 : i32
    return %arg0, %arg1 : i32, i32
  }
}

</mosaic_0001>

<llo_original>
// kernel: tpu_custom_call.1
$region0: #{tpu_custom_call.1}
  #allocation0 [shape = 'u32[]', space=smem, size = 0x4, offset = 0x4, fixed_abs, tag = 'smem constant byte address 0x4 - core index']
  #allocation1 [shape = 'u32[72,128]{1,0:T(1,128)}', space=vmem, size = 0x9000, scoped, tag = 'internal scratch']
  #allocation2 [shape = 'f32[8,32]{1,0:T(8,128)}', space=vmem, size = 0x1000, scoped, tag = 'scratch operand']
  %s0 = inlined_call_operand.hbm [shape: f32[16,32], index: 0, kind: input, shape index: {}]
  %s1 = inlined_call_operand.hbm [shape: f32[1,32], index: 1, kind: input, shape index: {}]
  %s2 = inlined_call_operand.hbm [shape: f32[32,32], index: 2, kind: input, shape index: {}]
  %s3 = inlined_call_operand.vmem [shape: f32[1,32], index: 3, kind: input, shape index: {}]
  %s4 = inlined_call_operand.hbm [shape: f32[16,32], index: 4, kind: output, shape index: {}]
  %s5 = sld [smem:[#allocation0]]
  $region65: #{tpu_custom_call.1} parent=0
    _
  %s7 = ssub.s32 1, %s5
  %s8 = scalar_select 0, %s7, %s5
  $region1: #{tpu_custom_call.1} parent=0
    #allocation3 [shape = 'u8[8192]{0}', space=vmem, size = 0x2000, scoped, tag = 'input window, operand 0']
    #allocation4 [shape = 's32[2]{0}', space=sflag, size = 0x8, scoped, tag = 'scoped memory for tpu_custom_call.1']
    #allocation5 [shape = 's32[2]{0}', space=sflag, size = 0x8, scoped, tag = 'scoped memory for tpu_custom_call.1']
    #allocation6 [shape = 'u8[512]{0}', space=vmem, size = 0x400, scoped, tag = 'input window, operand 1, single buffered']
    #allocation7 [shape = 's32[1]{0}', space=sflag, size = 0x4, scoped, tag = 'scoped memory for tpu_custom_call.1']
    #allocation8 [shape = 'u8[16384]{0}', space=vmem, size = 0x4000, scoped, tag = 'input window, operand 2, single buffered']
    #allocation9 [shape = 'u8[8192]{0}', space=vmem, size = 0x2000, scoped, tag = 'output window, operand 0']
    %9 = vsyncpa [#allocation4], 0
    %s10 = scalar_lea.sflag [#allocation4], 1
    %11 = vsyncpa %s10, 0
    %12 = vsyncpa [#allocation7], 0
    %13 = vsyncpa [#allocation5], 0
    %s14 = scalar_lea.sflag [#allocation5], 1
    %15 = vsyncpa %s14, 0
    loop: start=0, step=1, limit=4
    $region2: #{tpu_custom_call.1} parent=1 // loop_pre_header
      _
    $region3: #{tpu_custom_call.1} parent=1 // loop_header
      %s17 = sphi 0, %s21
      %p18 = scmp.ge.s32.totalorder %s17, 4
      %s24 = sphi 0, %s36
      %s25 = sphi 0, %s32
      %s26 = sphi 0, %s24
      %s27 = sphi 0, %s25
      %s28 = sphi 0, %s26
      %s29 = sphi 0, %s27
      %s39 = sphi 0, %s41
      %s42 = sphi 0, %s39
      %s43 = sphi 0, %s42
      %s59 = sphi 0, %s43
      %s63 = sphi 0, %s63
      %s65 = sphi 0, %s63
      %s66 = sphi 0, %s65
      %s80 = sphi 0, %s66
      %s86 = sphi 0, %s88
      %s89 = sphi 0, %s86
      %s90 = sphi 0, %s89
      %s106 = sphi 0, %s90
      %s112 = sphi 0, %s114
      %s115 = sphi 0, %s112
      %s116 = sphi 0, %s115
      %s132 = sphi 0, %s116
      %s140 = sphi 0, %s142
      %s143 = sphi 0, %s140
      %s144 = sphi 0, %s143
      %s160 = sphi 0, %s144
    $region4: #{tpu_custom_call.1} parent=1 // loop_header_branch
      %20 = sbr.rel (%p18) target = $region8
    $region5: #{tpu_custom_call.1} parent=1 // loop_body
      %s22 = ssub.s32 %s17, 1
      %s23 = ssub.s32 %s17, 2
      %s30 = sadd.s32 1, %s25
      %p31 = scmp.ge.s32.totalorder %s30, 1
      %s32 = scalar_select %p31, 0, %s30
      %s33 = sadd.s32 1, %s24
      %s34 = scalar_select %p31, %s33, %s24
      %p35 = scmp.ge.s32.totalorder %s34, 2
      %s36 = scalar_select %p35, 0, %s34
      %s37 = ssub.s32 %s24, %s36
      %p38 = scmp.eq.s32.totalorder %s37, 0
      %s40 = sadd.s32 %s39, 1
      %s41 = scalar_select %p38, %s39, %s40
      %p44 = pneg %p38
      %p45 = scmp.eq.s32.totalorder %s17, 1
      %p46 = por %p44, %p45
      %p47 = scmp.ne.s32.totalorder %s39, %s42
      %p48 = scmp.eq.s32.totalorder %s17, 0
      %p49 = por %p47, %p48
      %p50 = scmp.ne.s32.totalorder %s39, %s42
      %p51 = scmp.eq.s32.totalorder %s22, 1
      %p52 = por %p50, %p51
      %p53 = scmp.ne.s32.totalorder %s42, %s43
      %p54 = scmp.eq.s32.totalorder %s22, 0
      %p55 = por %p53, %p54
      %p56 = scmp.ne.s32.totalorder %s42, %s43
      %p57 = scmp.eq.s32.totalorder %s23, 1
      %p58 = por %p56, %p57
      %p60 = scmp.ne.s32.totalorder %s43, %s59
      %p61 = scmp.eq.s32.totalorder %s23, 0
      %p62 = por %p60, %p61
      %s64 = sadd.s32 %s63, 1
      %p67 = scmp.eq.s32.totalorder %s17, 1
      %p68 = scmp.ne.s32.totalorder %s63, %s65
      %p69 = scmp.eq.s32.totalorder %s17, 0
      %p70 = por %p68, %p69
      %p71 = scmp.ne.s32.totalorder %s63, %s65
      %p72 = scmp.eq.s32.totalorder %s22, 1
      %p73 = por %p71, %p72
      %p74 = scmp.ne.s32.totalorder %s65, %s66
      %p75 = scmp.eq.s32.totalorder %s22, 0
      %p76 = por %p74, %p75
      %p77 = scmp.ne.s32.totalorder %s65, %s66
      %p78 = scmp.eq.s32.totalorder %s23, 1
      %p79 = por %p77, %p78
      %p81 = scmp.ne.s32.totalorder %s66, %s80
      %p82 = scmp.eq.s32.totalorder %s23, 0
      %p83 = por %p81, %p82
      %s84 = ssub.s32 %s25, %s32
      %p85 = scmp.eq.s32.totalorder %s84, 0
      %s87 = sadd.s32 %s86, 1
      %s88 = scalar_select %p85, %s86, %s87
      %p91 = pneg %p85
      %p92 = scmp.eq.s32.totalorder %s17, 1
      %p93 = por %p91, %p92
      %p94 = scmp.ne.s32.totalorder %s86, %s89
      %p95 = scmp.eq.s32.totalorder %s17, 0
      %p96 = por %p94, %p95
      %p97 = scmp.ne.s32.totalorder %s86, %s89
      %p98 = scmp.eq.s32.totalorder %s22, 1
      %p99 = por %p97, %p98
      %p100 = scmp.ne.s32.totalorder %s89, %s90
      %p101 = scmp.eq.s32.totalorder %s22, 0
      %p102 = por %p100, %p101
      %p103 = scmp.ne.s32.totalorder %s89, %s90
      %p104 = scmp.eq.s32.totalorder %s23, 1
      %p105 = por %p103, %p104
      %p107 = scmp.ne.s32.totalorder %s90, %s106
      %p108 = scmp.eq.s32.totalorder %s23, 0
      %p109 = por %p107, %p108
      %s110 = ssub.s32 %s25, %s32
      %p111 = scmp.eq.s32.totalorder %s110, 0
      %s113 = sadd.s32 %s112, 1
      %s114 = scalar_select %p111, %s112, %s113
      %p117 = pneg %p111
      %p118 = scmp.eq.s32.totalorder %s17, 1
      %p119 = por %p117, %p118
      %p120 = scmp.ne.s32.totalorder %s112, %s115
      %p121 = scmp.eq.s32.totalorder %s17, 0
      %p122 = por %p120, %p121
      %p123 = scmp.ne.s32.totalorder %s112, %s115
      %p124 = scmp.eq.s32.totalorder %s22, 1
      %p125 = por %p123, %p124
      %p126 = scmp.ne.s32.totalorder %s115, %s116
      %p127 = scmp.eq.s32.totalorder %s22, 0
      %p128 = por %p126, %p127
      %p129 = scmp.ne.s32.totalorder %s115, %s116
      %p130 = scmp.eq.s32.totalorder %s23, 1
      %p131 = por %p129, %p130
      %p133 = scmp.ne.s32.totalorder %s116, %s132
      %p134 = scmp.eq.s32.totalorder %s23, 0
      %p135 = por %p133, %p134
      %s136 = ssub.s32 %s24, %s36
      %s137 = ssub.s32 %s25, %s32
      %s138 = sor.u32 %s136, %s137
      %p139 = scmp.eq.s32.totalorder %s138, 0
      %s141 = sadd.s32 %s140, 1
      %s142 = scalar_select %p139, %s140, %s141
      %p145 = pneg %p139
      %p146 = scmp.eq.s32.totalorder %s17, 1
      %p147 = por %p145, %p146
      %p148 = scmp.ne.s32.totalorder %s140, %s143
      %p149 = scmp.eq.s32.totalorder %s17, 0
      %p150 = por %p148, %p149
      %p151 = scmp.ne.s32.totalorder %s140, %s143
      %p152 = scmp.eq.s32.totalorder %s22, 1
      %p153 = por %p151, %p152
      %p154 = scmp.ne.s32.totalorder %s143, %s144
      %p155 = scmp.eq.s32.totalorder %s22, 0
      %p156 = por %p154, %p155
      %p157 = scmp.ne.s32.totalorder %s143, %s144
      %p158 = scmp.eq.s32.totalorder %s23, 1
      %p159 = por %p157, %p158
      %p161 = scmp.ne.s32.totalorder %s144, %s160
      %p162 = scmp.eq.s32.totalorder %s23, 0
      %p163 = por %p161, %p162
      %p164 = scmp.le.s32.totalorder 1, %s17
      %p165 = scmp.lt.s32.totalorder %s17, 3
      %p166 = pnand %p164, %p165
      %p167 = pneg %p166
      // Predicated region
      $region9: #{tpu_custom_call.1} parent=5 // pred_check
        _
      $region10: #{tpu_custom_call.1} parent=5 // pred_check_branch
        %169 = sbr.rel (%p166) target = $region12
      $region11: #{tpu_custom_call.1} parent=5 // pred_region
        %s170 = ssub.s32 %s17, 1
        // Predicated region
        $region13: #{tpu_custom_call.1} parent=11 // pred_check
          %p171 = pneg %p76
        $region14: #{tpu_custom_call.1} parent=11 // pred_check_branch
          %173 = sbr.rel (%p171) target = $region16
        $region15: #{tpu_custom_call.1} parent=11 // pred_region
          %175 = vsyncadd [#allocation7], 0
          %s177 = sshll.u32 %s1, 4
          %s178 = int_to_ptr.hbm [resolvable:$true] %s177
          %s179 = sshll.u32 [#allocation6], 4
          %s180 = int_to_ptr.vmem [resolvable:$true] %s179
          %182 = dma.hbm_to_vmem [thread:$0]  %s178, 16, %s180, [#allocation7]
        $region16: #{tpu_custom_call.1} parent=11 // pred_fallthru
          _
        // Predicated region
        $region17: #{tpu_custom_call.1} parent=11 // pred_check
          %p183 = pneg %p102
        $region18: #{tpu_custom_call.1} parent=11 // pred_check_branch
          %185 = sbr.rel (%p183) target = $region20
        $region19: #{tpu_custom_call.1} parent=11 // pred_region
          %187 = vsyncadd [#allocation7], 0
          %s188 = smul.addr %s27, 8
          %s189 = scalar_lea.hbm %s2, %s188
          %s190 = sshll.u32 %s189, 4
          %s191 = int_to_ptr.hbm [resolvable:$true] %s190
          %s192 = sshll.u32 [#allocation8], 4
          %s193 = int_to_ptr.vmem [resolvable:$true] %s192
          %198 = dma.hbm_to_vmem [thread:$0]  %s191, 512, %s193, [#allocation7], 128, 128, 8
        $region20: #{tpu_custom_call.1} parent=11 // pred_fallthru
          _
        // Predicated region
        $region21: #{tpu_custom_call.1} parent=11 // pred_check
          %p199 = pneg %p128
        $region22: #{tpu_custom_call.1} parent=11 // pred_check_branch
          %201 = sbr.rel (%p199) target = $region24
        $region23: #{tpu_custom_call.1} parent=11 // pred_region
          %p202 = scmp.lt.s32.totalorder %s27, 0
          %s203 = scalar_select %p202, %s27, 0
          %s204 = scalar_lea.vmem %s3, %s203
        $region24: #{tpu_custom_call.1} parent=11 // pred_fallthru
          _
      $region12: #{tpu_custom_call.1} parent=5 // pred_fallthru
        _
      %p205 = scmp.lt.s32.totalorder %s17, 2
      // Predicated region
      $region25: #{tpu_custom_call.1} parent=5 // pred_check
        %p206 = pneg %p205
      $region26: #{tpu_custom_call.1} parent=5 // pred_check_branch
        %208 = sbr.rel (%p206) target = $region28
      $region27: #{tpu_custom_call.1} parent=5 // pred_region
        // Predicated region
        $region29: #{tpu_custom_call.1} parent=27 // pred_check
          %p209 = pneg %p49
        $region30: #{tpu_custom_call.1} parent=27 // pred_check_branch
          %211 = sbr.rel (%p209) target = $region32
        $region31: #{tpu_custom_call.1} parent=27 // pred_region
          %s212 = sand.u32 %s39, 1
          %s213 = scalar_lea.sflag [#allocation4], %s212
          %s214 = sand.u32 %s39, 1
          %s215 = smul.addr %s214, 8
          %s216 = scalar_lea.vmem [#allocation3], %s215
          %218 = vsyncadd %s213, 0
          %s219 = smul.addr %s24, 8
          %s220 = scalar_lea.hbm %s0, %s219
          %s222 = sshll.u32 %s220, 4
          %s223 = int_to_ptr.hbm [resolvable:$true] %s222
          %s224 = sshll.u32 %s216, 4
          %s225 = int_to_ptr.vmem [resolvable:$true] %s224
          %227 = dma.hbm_to_vmem [thread:$0]  %s223, 128, %s225, %s213
        $region32: #{tpu_custom_call.1} parent=27 // pred_fallthru
          _
      $region28: #{tpu_custom_call.1} parent=5 // pred_fallthru
        _
      %p228 = scmp.le.s32.totalorder 1, %s17
      %p229 = scmp.lt.s32.totalorder %s17, 3
      %p230 = pnand %p228, %p229
      %p231 = pneg %p230
      // Predicated region
      $region33: #{tpu_custom_call.1} parent=5 // pred_check
        _
      $region34: #{tpu_custom_call.1} parent=5 // pred_check_branch
        %233 = sbr.rel (%p230) target = $region36
      $region35: #{tpu_custom_call.1} parent=5 // pred_region
        %s234 = ssub.s32 %s17, 1
        %s235 = sand.u32 %s42, 1
        %s236 = scalar_lea.sflag [#allocation4], %s235
        %s237 = sand.u32 %s42, 1
        %s238 = smul.addr %s237, 8
        %s239 = scalar_lea.vmem [#allocation3], %s238
        // Predicated region
        $region37: #{tpu_custom_call.1} parent=35 // pred_check
          %p240 = pneg %p55
        $region38: #{tpu_custom_call.1} parent=35 // pred_check_branch
          %242 = sbr.rel (%p240) target = $region40
        $region39: #{tpu_custom_call.1} parent=35 // pred_region
          %244 = dma.done %s236, 128
        $region40: #{tpu_custom_call.1} parent=35 // pred_fallthru
          _
        // Predicated region
        $region41: #{tpu_custom_call.1} parent=35 // pred_check
          %p245 = pneg %p76
        $region42: #{tpu_custom_call.1} parent=35 // pred_check_branch
          %247 = sbr.rel (%p245) target = $region44
        $region43: #{tpu_custom_call.1} parent=35 // pred_region
          %249 = dma.done [#allocation7], 16
        $region44: #{tpu_custom_call.1} parent=35 // pred_fallthru
          _
        // Predicated region
        $region45: #{tpu_custom_call.1} parent=35 // pred_check
          %p250 = pneg %p102
        $region46: #{tpu_custom_call.1} parent=35 // pred_check_branch
          %252 = sbr.rel (%p250) target = $region48
        $region47: #{tpu_custom_call.1} parent=35 // pred_region
          %254 = dma.done [#allocation7], 512
        $region48: #{tpu_custom_call.1} parent=35 // pred_fallthru
          _
        %s255 = sand.u32 %s42, 1
        %s256 = scalar_lea.sflag [#allocation4], %s255
        %s257 = sand.u32 %s42, 1
        %s258 = smul.addr %s257, 8
        %s259 = scalar_lea.vmem [#allocation3], %s258
        %p260 = pneg %p55
        %p261 = pneg %p52
        %p262 = pneg %p76
        %p263 = pneg %p73
        %p264 = pneg %p102
        %p265 = pneg %p99
        %p266 = scmp.lt.s32.totalorder %s27, 0
        %s267 = scalar_select %p266, %s27, 0
        %s268 = scalar_lea.vmem %s3, %s267
        %p269 = pneg %p128
        %p270 = pneg %p125
        %p271 = pneg %p156
        %p272 = pneg %p153
        %s273 = sand.u32 %s143, 1
        %s274 = scalar_lea.sflag [#allocation5], %s273
        %s275 = sand.u32 %s143, 1
        %s276 = smul.addr %s275, 8
        %s277 = scalar_lea.vmem [#allocation9], %s276
        %p278 = scmp.lt.s32.totalorder %s27, 0
        %s279 = scalar_select %p278, %s27, 0
        %s280 = scalar_lea.vmem %s3, %s279
        %p281 = scmp.eq.s32.totalorder %s27, 0
        // Predicated region
        $region49: #{tpu_custom_call.1} parent=35 // pred_check
          %p282 = pneg %p281
        $region50: #{tpu_custom_call.1} parent=35 // pred_check_branch
          %284 = sbr.rel (%p282) target = $region52
        $region51: #{tpu_custom_call.1} parent=35 // pred_region
          %v285 = vld [vmem:[%s239] sm:$0xff]
          %vm286 = vcmask 261120
          %v287 = vsel %vm286, %v285, 0.0
          %288 = vadd.xlane.f32.xlu0 %v287
          %v289 = vpop.xlane.xlu0 %288
          %v290 = vmul.f32 %v285, %v285
          %v291 = vsel %vm286, %v290, 0.0
          %292 = vadd.xlane.f32.xlu0 %v291
          %v293 = vpop.xlane.xlu0 %292
          %v294 = vmul.f32 %v289, 0.03125
          %v295 = vmul.f32 %v293, 0.03125
          %v296 = vmul.f32 %v294, %v294
          %v297 = vsub.f32 %v295, %v296
          %v298 = vmax.f32 %v297, 0.0
          %v299 = vadd.f32 %v298, 1e-05
          %v300 = vrsqrt.pop %v299
          %v301 = vmul.f32 %v300, %v299
          %v302 = vmul.f32 %v301, %v300
          %v303 = vmul.f32 0.5, %v302
          %v304 = vsub.f32 1.5, %v303
          %v305 = vmul.f32 %v300, %v304
          %vm306 = vweird.f32 %v299
          %vm307 = vweird.f32 %v300
          %vm308 = vmor %vm306, %vm307
          %v309 = vsel %vm308, %v300, %v305
          %v310 = vsub.f32 %v285, %v294
          %v311 = vmul.f32 %v310, %v309
          %v312 = vld [vmem:[#allocation6] sm:$0x1]
          %v314 = vperm.slane %v312, 0
          %v316 = vmul.f32 %v311, %v314
          %317 = vst.msk [vmem:[#allocation2] sm:$0xff] %vm286, %v316
        $region52: #{tpu_custom_call.1} parent=35 // pred_fallthru
          _
        %v318 = vld [vmem:[#allocation2] sm:$0xff]
        %v319 = vld [vmem:[#allocation8] sm:$0xff]
        %v320 = vld [vmem:[#allocation8 + $0x8] sm:$0xff]
        %v321 = vld [vmem:[#allocation8 + $0x10] sm:$0xff]
        %v322 = vld [vmem:[#allocation8 + $0x18] sm:$0xff]
        %v323 = vld [vmem:[%s280] sm:$0x1]
        %v325 = vperm.slane %v323, 0
        %vm327 = vcmask 261120
        %v329 = vsel %vm327, %v318, 0
        %331 = vmatpush.msra.mxu0 0.0
        %332 = vmatpush.msra.mxu0 0.0
        %333 = vmatpush.msra.mxu0 0.0
        %334 = vmatpush.msra.mxu0 0.0
        %335 = vmatpush.msra.mxu0 0.0
        %336 = vmatpush.msra.mxu0 0.0
        %337 = vmatpush.msra.mxu0 0.0
        %338 = vmatpush.msra.mxu0 0.0
        %339 = vmatpush.msra.mxu0 0.0
        %340 = vmatpush.msra.mxu0 0.0
        %341 = vmatpush.msra.mxu0 0.0
        %342 = vmatpush.msra.mxu0 0.0
        %343 = vmatpush.msra.mxu0 %v322
        %344 = vmatpush.msra.mxu0 %v321
        %345 = vmatpush.msra.mxu0 %v320
        %346 = vmatpush.msra.mxu0 %v319
        %347 = vmatmul.f32.gmra.mxu0 %v329
        %v348 = vpop.f32.mrf.mxu0
        %v349 = vadd.f32 %v325, %v348
        %350 = vdwg.mxu0
        %351 = vst.msk [vmem:[%s277] sm:$0xff] %vm327, %v349
        %s352 = sand.u32 %s143, 1
        %s353 = scalar_lea.sflag [#allocation5], %s352
        %s354 = sand.u32 %s143, 1
        %s355 = smul.addr %s354, 8
        %s356 = scalar_lea.vmem [#allocation9], %s355
        // Predicated region
        $region53: #{tpu_custom_call.1} parent=35 // pred_check
          %p357 = pneg %p153
        $region54: #{tpu_custom_call.1} parent=35 // pred_check_branch
          %359 = sbr.rel (%p357) target = $region56
        $region55: #{tpu_custom_call.1} parent=35 // pred_region
          %361 = vsyncadd %s353, 0
          %s362 = sadd.s32 %s27, %s26
          %s363 = smul.addr %s362, 8
          %s364 = scalar_lea.hbm %s4, %s363
          %s366 = sshll.u32 %s356, 4
          %s367 = int_to_ptr.vmem [resolvable:$true] %s366
          %s368 = sshll.u32 %s364, 4
          %s369 = int_to_ptr.hbm [resolvable:$true] %s368
          %371 = dma.vmem_to_hbm [thread:$0]  %s367, 128, %s369, %s353
        $region56: #{tpu_custom_call.1} parent=35 // pred_fallthru
          _
      $region36: #{tpu_custom_call.1} parent=5 // pred_fallthru
        _
      %p372 = scmp.le.s32.totalorder 2, %s17
      // Predicated region
      $region57: #{tpu_custom_call.1} parent=5 // pred_check
        %p373 = pneg %p372
      $region58: #{tpu_custom_call.1} parent=5 // pred_check_branch
        %375 = sbr.rel (%p373) target = $region60
      $region59: #{tpu_custom_call.1} parent=5 // pred_region
        %s376 = ssub.s32 %s17, 2
        // Predicated region
        $region61: #{tpu_custom_call.1} parent=59 // pred_check
          %p377 = pneg %p159
        $region62: #{tpu_custom_call.1} parent=59 // pred_check_branch
          %379 = sbr.rel (%p377) target = $region64
        $region63: #{tpu_custom_call.1} parent=59 // pred_region
          %s380 = sand.u32 %s144, 1
          %s381 = scalar_lea.sflag [#allocation5], %s380
          %s382 = sand.u32 %s144, 1
          %s383 = smul.addr %s382, 8
          %s384 = scalar_lea.vmem [#allocation9], %s383
          %386 = dma.done %s381, 128
        $region64: #{tpu_custom_call.1} parent=59 // pred_fallthru
          _
      $region60: #{tpu_custom_call.1} parent=5 // pred_fallthru
        _
    $region6: #{tpu_custom_call.1} parent=1 // loop_footer
      %s21 = sadd.s32 1, %s17
    $region7: #{tpu_custom_call.1} parent=1 // loop_footer_branch
      %16 = sbr.rel target = $region3
    $region8: #{tpu_custom_call.1} parent=1 // loop_exit
      _
    %387 = vsyncpa [#allocation4], 1
    %s388 = scalar_lea.sflag [#allocation4], 1
    %389 = vsyncpa %s388, 1
    %390 = vsyncpa [#allocation7], 1
    %391 = vsyncpa [#allocation5], 1
    %s392 = scalar_lea.sflag [#allocation5], 1
    %393 = vsyncpa %s392, 1

</llo_original>
